<compile_context>
chip_gen: v6e
topology: v6e:2x2x1
jax: 0.10.0
libtpu: 0.0.40
codegen_flags: <defaults>
</compile_context>

<pallas_src>
import jax
import jax.numpy as jnp
from jax import lax
from jax.experimental import pallas as pl
from jax.experimental.pallas import tpu as pltpu


def _action_mask_kernel(obs_ref, mask_ref,
                        w1_ref, b1_ref, w2_ref, b2_ref, w3_ref, b3_ref,
                        out_ref):
    # fc1 + relu  (f32 operands, f32 accumulation)
    x = obs_ref[...]                                                   # (TB, 10)
    h1 = jnp.dot(x, w1_ref[...], preferred_element_type=jnp.float32) + b1_ref[...]
    h1 = jnp.maximum(h1, 0.0)                                          # (TB, 64)

    # fc2 + relu
    h2 = jnp.dot(h1, w2_ref[...], preferred_element_type=jnp.float32) + b2_ref[...]
    h2 = jnp.maximum(h2, 0.0)                                          # (TB, 64)

    # logits layer (natural action width A)
    logits = jnp.dot(h2, w3_ref[...],
                     preferred_element_type=jnp.float32) + b3_ref[...]  # (TB, A)

    # Action-mask epilogue — exact PyTorch semantics:
    #   rows whose mask sums to ~0 get action 0 forced valid, then
    #   masked_logits = logits + (1 - mask) * (-1e20).
    mask = mask_ref[...]                                               # (TB, A)
    zero_rows = jnp.sum(mask, axis=1, keepdims=True) < 1e-8            # (TB, 1)
    col0 = lax.broadcasted_iota(jnp.int32, mask.shape, 1) == 0         # (TB, A)
    mask_eff = jnp.where(jnp.logical_and(zero_rows, col0), 1.0, mask)
    out_ref[...] = logits + (1.0 - mask_eff) * (-1e20)


def action_mask_forward(obs, mask, params, *, tile_b=2048):
    """obs: (B, 10) f32, mask: (B, A) f32 -> masked logits (B, A) f32."""
    obs = jnp.asarray(obs, jnp.float32)
    mask = jnp.asarray(mask, jnp.float32)
    B, OBS = obs.shape
    A = mask.shape[1]
    w1, b1, w2, b2, w3, b3 = params
    H = w1.shape[1]

    # Sublane-aligned batch tile (multiple of 8).
    B_ceil8 = 8 * pl.cdiv(B, 8)
    TB = min(tile_b, B_ceil8)
    # v7x megacore: ensure >=2 grid steps when the batch allows it so
    # dimension_semantics=("parallel",) can shard across both TensorCores.
    half = 8 * ((B_ceil8 // 2) // 8)
    if half >= 8 and TB > half:
        TB = half
    B_pad = TB * pl.cdiv(B, TB)

    # Row padding only (no lane padding).  Padded rows: zero obs + zero mask,
    # produce garbage logits that are sliced off below.
    if B_pad != B:
        obs_p = jnp.zeros((B_pad, OBS), jnp.float32).at[:B].set(obs)
        mask_p = jnp.zeros((B_pad, A), jnp.float32).at[:B].set(mask)
    else:
        obs_p, mask_p = obs, mask

    resident = lambda i: (0, 0)  # weights/biases: same block every step -> stay in VMEM
    out = pl.pallas_call(
        _action_mask_kernel,
        out_shape=jax.ShapeDtypeStruct((B_pad, A), jnp.float32),
        grid_spec=pltpu.PrefetchScalarGridSpec(
            num_scalar_prefetch=0,
            grid=(B_pad // TB,),
            in_specs=[
                pl.BlockSpec((TB, OBS), lambda i: (i, 0)),   # obs tile
                pl.BlockSpec((TB, A), lambda i: (i, 0)),     # mask tile (natural width)
                pl.BlockSpec((OBS, H), resident),            # W1
                pl.BlockSpec((1, H), resident),              # b1
                pl.BlockSpec((H, H), resident),              # W2
                pl.BlockSpec((1, H), resident),              # b2
                pl.BlockSpec((H, A), resident),              # W3
                pl.BlockSpec((1, A), resident),              # b3
            ],
            out_specs=pl.BlockSpec((TB, A), lambda i: (i, 0)),
        ),
        compiler_params=pltpu.CompilerParams(
            dimension_semantics=("parallel",)),               # megacore on v7x
    )(obs_p, mask_p, w1, b1, w2, b2, w3, b3)
    return out[:B] if B_pad != B else out


def _xavier_uniform(key, fan_in, fan_out):
    bound = jnp.sqrt(6.0 / (fan_in + fan_out))
    # stored as (in, out) so the kernel computes x @ W
    return jax.random.uniform(key, (fan_in, fan_out), jnp.float32, -bound, bound)


def init_params(key, obs_size=10, hidden_dim=64, action_dim=6):
    k1, k2, k3 = jax.random.split(key, 3)
    w1 = _xavier_uniform(k1, obs_size, hidden_dim)
    b1 = jnp.zeros((1, hidden_dim), jnp.float32)
    w2 = _xavier_uniform(k2, hidden_dim, hidden_dim)
    b2 = jnp.zeros((1, hidden_dim), jnp.float32)
    w3 = _xavier_uniform(k3, hidden_dim, action_dim)
    b3 = jnp.zeros((1, action_dim), jnp.float32)
    return (w1, b1, w2, b2, w3, b3)


def reference_forward(obs, mask, params):
    """Pure-JAX f32 reference mirroring the PyTorch module semantics exactly."""
    w1, b1, w2, b2, w3, b3 = params
    hi = jax.lax.Precision.HIGHEST
    x = jnp.maximum(jnp.dot(obs, w1, precision=hi) + b1, 0.0)
    x = jnp.maximum(jnp.dot(x, w2, precision=hi) + b2, 0.0)
    logits = jnp.dot(x, w3, precision=hi) + b3
    sum_mask = mask.sum(axis=1, keepdims=True)
    zero_rows = sum_mask < 1e-8
    col0 = jnp.arange(mask.shape[1])[None, :] == 0
    mask_eff = jnp.where(jnp.logical_and(zero_rows, col0), 1.0, mask)
    return logits + (1.0 - mask_eff) * (-1e20)


if __name__ == "__main__":
    key = jax.random.PRNGKey(0)
    k_obs, k_mask, k_params, k_obs2, k_mask2 = jax.random.split(key, 5)

    B, OBS, ACT = 2, 10, 6
    params = init_params(k_params, obs_size=OBS, hidden_dim=64, action_dim=ACT)

    # Case 1: tiny batch; row 0 has a fractional mask entry (exercises the exact
    # (1 - mask) * -1e20 formula), row 1 is all-zero (fallback forces action 0).
    obs = jax.random.normal(k_obs, (B, OBS), jnp.float32)
    mask = jnp.stack([
        jnp.array([1.0, 0.0, 1.0, 1.0, 0.5, 1.0], jnp.float32),
        jnp.zeros((ACT,), jnp.float32),
    ])
    out = jax.block_until_ready(action_mask_forward(obs, mask, params))
    ref = reference_forward(obs, mask, params)
    assert out.shape == (B, ACT)
    # Tolerance covers MXU f32-matmul internal precision (bf16 passes) vs XLA HIGHEST.
    assert jnp.allclose(out, ref, rtol=1e-2, atol=1e-2), "mismatch vs reference (case 1)"

    # Case 2: batch not a multiple of the tile, multi-step grid, random binary
    # mask with one all-zero row — exercises row padding, pipelining, fallback.
    B2 = 100
    obs2 = jax.random.normal(k_obs2, (B2, OBS), jnp.float32)
    mask2 = jax.random.bernoulli(k_mask2, 0.5, (B2, ACT)).astype(jnp.float32)
    mask2 = mask2.at[5].set(0.0)
    out2 = jax.block_until_ready(action_mask_forward(obs2, mask2, params, tile_b=32))
    ref2 = reference_forward(obs2, mask2, params)
    assert out2.shape == (B2, ACT)
    assert jnp.allclose(out2, ref2, rtol=1e-2, atol=1e-2), "mismatch vs reference (case 2)"

    # Case 3: default (large) tile path on a medium batch.
    B3 = 1000
    obs3 = jax.random.normal(k_obs, (B3, OBS), jnp.float32)
    mask3 = jax.random.bernoulli(k_mask, 0.5, (B3, ACT)).astype(jnp.float32)
    out3 = jax.block_until_ready(action_mask_forward(obs3, mask3, params))
    ref3 = reference_forward(obs3, mask3, params)
    assert out3.shape == (B3, ACT)
    assert jnp.allclose(out3, ref3, rtol=1e-2, atol=1e-2), "mismatch vs reference (case 3)"

    print("KERNEL_OK")
</pallas_src>

<mosaic_0001>
module attributes {stable_mosaic.version = 11 : i64} {
  func.func @_action_mask_kernel(%arg0: i32, %arg1: memref<8x10xf32, #tpu.memory_space<vmem>>, %arg2: memref<8x6xf32, #tpu.memory_space<vmem>>, %arg3: memref<10x64xf32, #tpu.memory_space<vmem>>, %arg4: memref<1x64xf32, #tpu.memory_space<vmem>>, %arg5: memref<64x64xf32, #tpu.memory_space<vmem>>, %arg6: memref<1x64xf32, #tpu.memory_space<vmem>>, %arg7: memref<64x6xf32, #tpu.memory_space<vmem>>, %arg8: memref<1x6xf32, #tpu.memory_space<vmem>>, %arg9: memref<8x6xf32, #tpu.memory_space<vmem>>) attributes {dimension_semantics = [#tpu.dimension_semantics<parallel>], iteration_bounds = array<i64: 1>, scalar_prefetch = 0 : i64, scratch_operands = 0 : i64, tpu.core_type = #tpu.core_type<tc>, window_params = [{transform_indices = @transform_0, window_bounds = array<i64: 8, 10>}, {transform_indices = @transform_1, window_bounds = array<i64: 8, 6>}, {pipeline_mode = #tpu.pipeline_mode<synchronous>, transform_indices = @transform_2, window_bounds = array<i64: 10, 64>}, {pipeline_mode = #tpu.pipeline_mode<synchronous>, transform_indices = @transform_3, window_bounds = array<i64: 1, 64>}, {pipeline_mode = #tpu.pipeline_mode<synchronous>, transform_indices = @transform_4, window_bounds = array<i64: 64, 64>}, {pipeline_mode = #tpu.pipeline_mode<synchronous>, transform_indices = @transform_5, window_bounds = array<i64: 1, 64>}, {pipeline_mode = #tpu.pipeline_mode<synchronous>, transform_indices = @transform_6, window_bounds = array<i64: 64, 6>}, {pipeline_mode = #tpu.pipeline_mode<synchronous>, transform_indices = @transform_7, window_bounds = array<i64: 1, 6>}, {transform_indices = @transform_8, window_bounds = array<i64: 8, 6>}]} {
    %c0 = arith.constant 0 : index
    %c0_0 = arith.constant 0 : index
    %0 = vector.load %arg1[%c0, %c0_0] : memref<8x10xf32, #tpu.memory_space<vmem>>, vector<8x10xf32>
    %c0_1 = arith.constant 0 : index
    %c0_2 = arith.constant 0 : index
    %1 = vector.load %arg3[%c0_1, %c0_2] : memref<10x64xf32, #tpu.memory_space<vmem>>, vector<10x64xf32>
    %cst = arith.constant dense<0.000000e+00> : vector<8x64xf32>
    %2 = tpu.matmul %0, %1, %cst {dimension_numbers = #tpu.dot_dimension_numbers<[1], [0], [0], [1], [0, 0, 1, 1], [], []>} : vector<8x10xf32>, vector<10x64xf32>, vector<8x64xf32> -> vector<8x64xf32>
    %c0_3 = arith.constant 0 : index
    %c0_4 = arith.constant 0 : index
    %3 = vector.load %arg4[%c0_3, %c0_4] : memref<1x64xf32, #tpu.memory_space<vmem>>, vector<1x64xf32>
    %4 = vector.broadcast %3 : vector<1x64xf32> to vector<8x64xf32>
    %5 = arith.addf %2, %4 : vector<8x64xf32>
    %cst_5 = arith.constant 0.000000e+00 : f32
    %6 = vector.broadcast %cst_5 : f32 to vector<8x64xf32>
    %7 = arith.maximumf %5, %6 : vector<8x64xf32>
    %c0_6 = arith.constant 0 : index
    %c0_7 = arith.constant 0 : index
    %8 = vector.load %arg5[%c0_6, %c0_7] : memref<64x64xf32, #tpu.memory_space<vmem>>, vector<64x64xf32>
    %cst_8 = arith.constant dense<0.000000e+00> : vector<8x64xf32>
    %9 = tpu.matmul %7, %8, %cst_8 {dimension_numbers = #tpu.dot_dimension_numbers<[1], [0], [0], [1], [0, 0, 1, 1], [], []>} : vector<8x64xf32>, vector<64x64xf32>, vector<8x64xf32> -> vector<8x64xf32>
    %c0_9 = arith.constant 0 : index
    %c0_10 = arith.constant 0 : index
    %10 = vector.load %arg6[%c0_9, %c0_10] : memref<1x64xf32, #tpu.memory_space<vmem>>, vector<1x64xf32>
    %11 = vector.broadcast %10 : vector<1x64xf32> to vector<8x64xf32>
    %12 = arith.addf %9, %11 : vector<8x64xf32>
    %cst_11 = arith.constant 0.000000e+00 : f32
    %13 = vector.broadcast %cst_11 : f32 to vector<8x64xf32>
    %14 = arith.maximumf %12, %13 : vector<8x64xf32>
    %c0_12 = arith.constant 0 : index
    %c0_13 = arith.constant 0 : index
    %15 = vector.load %arg7[%c0_12, %c0_13] : memref<64x6xf32, #tpu.memory_space<vmem>>, vector<64x6xf32>
    %cst_14 = arith.constant dense<0.000000e+00> : vector<8x6xf32>
    %16 = tpu.matmul %14, %15, %cst_14 {dimension_numbers = #tpu.dot_dimension_numbers<[1], [0], [0], [1], [0, 0, 1, 1], [], []>} : vector<8x64xf32>, vector<64x6xf32>, vector<8x6xf32> -> vector<8x6xf32>
    %c0_15 = arith.constant 0 : index
    %c0_16 = arith.constant 0 : index
    %17 = vector.load %arg8[%c0_15, %c0_16] : memref<1x6xf32, #tpu.memory_space<vmem>>, vector<1x6xf32>
    %18 = vector.broadcast %17 : vector<1x6xf32> to vector<8x6xf32>
    %19 = arith.addf %16, %18 : vector<8x6xf32>
    %c0_17 = arith.constant 0 : index
    %c0_18 = arith.constant 0 : index
    %20 = vector.load %arg2[%c0_17, %c0_18] : memref<8x6xf32, #tpu.memory_space<vmem>>, vector<8x6xf32>
    %cst_19 = arith.constant dense<0.000000e+00> : vector<8xf32>
    %21 = vector.multi_reduction <add>, %20, %cst_19 [1] : vector<8x6xf32> to vector<8xf32>
    %22 = vector.shape_cast %21 : vector<8xf32> to vector<8x1xf32>
    %cst_20 = arith.constant 9.99999993E-9 : f32
    %23 = vector.broadcast %cst_20 : f32 to vector<8x1xf32>
    %24 = arith.cmpf olt, %22, %23 : vector<8x1xf32>
    %25 = tpu.iota {dimensions = array<i32: 1>} : vector<8x6xi32>
    %c0_i32 = arith.constant 0 : i32
    %26 = vector.broadcast %c0_i32 : i32 to vector<8x6xi32>
    %27 = arith.cmpi eq, %25, %26 : vector<8x6xi32>
    %28 = vector.broadcast %24 : vector<8x1xi1> to vector<8x6xi1>
    %29 = arith.andi %28, %27 : vector<8x6xi1>
    %cst_21 = arith.constant 1.000000e+00 : f32
    %30 = vector.broadcast %cst_21 : f32 to vector<8x6xf32>
    %31 = arith.select %29, %30, %20 : vector<8x6xi1>, vector<8x6xf32>
    %cst_22 = arith.constant 1.000000e+00 : f32
    %32 = vector.broadcast %cst_22 : f32 to vector<8x6xf32>
    %33 = arith.subf %32, %31 : vector<8x6xf32>
    %cst_23 = arith.constant -1.000000e+20 : f32
    %34 = vector.broadcast %cst_23 : f32 to vector<8x6xf32>
    %35 = arith.mulf %33, %34 : vector<8x6xf32>
    %36 = arith.addf %19, %35 : vector<8x6xf32>
    %c0_24 = arith.constant 0 : index
    %c0_25 = arith.constant 0 : index
    %37 = vector.load %arg9[%c0_24, %c0_25] : memref<8x6xf32, #tpu.memory_space<vmem>>, vector<8x6xf32>
    tpu.vector_store %arg9[%c0_24, %c0_25], %36 {strides = array<i32>} : memref<8x6xf32, #tpu.memory_space<vmem>>, vector<8x6xf32>,
    return
  }
  func.func @transform_0(%arg0: i32) -> (i32, i32) {
    %c0_i32 = arith.constant 0 : i32
    %c0_i32_0 = arith.constant 0 : i32
    return %arg0, %c0_i32 : i32, i32
  }
  func.func @transform_1(%arg0: i32) -> (i32, i32) {
    %c0_i32 = arith.constant 0 : i32
    %c0_i32_0 = arith.constant 0 : i32
    return %arg0, %c0_i32 : i32, i32
  }
  func.func @transform_2(%arg0: i32) -> (i32, i32) {
    %c0_i32 = arith.constant 0 : i32
    %c0_i32_0 = arith.constant 0 : i32
    %c0_i32_1 = arith.constant 0 : i32
    return %c0_i32, %c0_i32_0 : i32, i32
  }
  func.func @transform_3(%arg0: i32) -> (i32, i32) {
    %c0_i32 = arith.constant 0 : i32
    %c0_i32_0 = arith.constant 0 : i32
    %c0_i32_1 = arith.constant 0 : i32
    return %c0_i32, %c0_i32_0 : i32, i32
  }
  func.func @transform_4(%arg0: i32) -> (i32, i32) {
    %c0_i32 = arith.constant 0 : i32
    %c0_i32_0 = arith.constant 0 : i32
    %c0_i32_1 = arith.constant 0 : i32
    return %c0_i32, %c0_i32_0 : i32, i32
  }
  func.func @transform_5(%arg0: i32) -> (i32, i32) {
    %c0_i32 = arith.constant 0 : i32
    %c0_i32_0 = arith.constant 0 : i32
    %c0_i32_1 = arith.constant 0 : i32
    return %c0_i32, %c0_i32_0 : i32, i32
  }
  func.func @transform_6(%arg0: i32) -> (i32, i32) {
    %c0_i32 = arith.constant 0 : i32
    %c0_i32_0 = arith.constant 0 : i32
    %c0_i32_1 = arith.constant 0 : i32
    return %c0_i32, %c0_i32_0 : i32, i32
  }
  func.func @transform_7(%arg0: i32) -> (i32, i32) {
    %c0_i32 = arith.constant 0 : i32
    %c0_i32_0 = arith.constant 0 : i32
    %c0_i32_1 = arith.constant 0 : i32
    return %c0_i32, %c0_i32_0 : i32, i32
  }
  func.func @transform_8(%arg0: i32) -> (i32, i32) {
    %c0_i32 = arith.constant 0 : i32
    %c0_i32_0 = arith.constant 0 : i32
    return %arg0, %c0_i32 : i32, i32
  }
}

</mosaic_0001>

<llo_original>
// kernel: tpu_custom_call.1
$region0: #{tpu_custom_call.1}
  #allocation0 [shape = 'u32[]', space=smem, size = 0x4, offset = 0x4, fixed_abs, tag = 'smem constant byte address 0x4 - core index']
  #allocation1 [shape = 'u32[144,128]{1,0:T(1,128)}', space=vmem, size = 0x12000, scoped, tag = 'internal scratch']
  %s0 = inlined_call_operand.vmem [shape: f32[8,10], index: 0, kind: input, shape index: {}]
  %s1 = inlined_call_operand.hbm [shape: f32[8,6], index: 1, kind: input, shape index: {}]
  %s2 = inlined_call_operand.hbm [shape: f32[10,64], index: 2, kind: input, shape index: {}]
  %s3 = inlined_call_operand.vmem [shape: f32[1,64], index: 3, kind: input, shape index: {}]
  %s4 = inlined_call_operand.vmem [shape: f32[64,64], index: 4, kind: input, shape index: {}]
  %s5 = inlined_call_operand.vmem [shape: f32[1,64], index: 5, kind: input, shape index: {}]
  %s6 = inlined_call_operand.vmem [shape: f32[64,6], index: 6, kind: input, shape index: {}]
  %s7 = inlined_call_operand.vmem [shape: f32[1,6], index: 7, kind: input, shape index: {}]
  %s8 = inlined_call_operand.hbm [shape: f32[8,6], index: 8, kind: output, shape index: {}]
  %s9 = sld [smem:[#allocation0]]
  $region50: #{tpu_custom_call.1} parent=0
    _
  %s11 = ssub.s32 1, %s9
  %s12 = scalar_select 0, %s11, %s9
  $region1: #{tpu_custom_call.1} parent=0
    #allocation2 [shape = 'u8[4096]{0}', space=vmem, size = 0x1000, scoped, tag = 'input window, operand 1, single buffered']
    #allocation3 [shape = 's32[1]{0}', space=sflag, size = 0x4, scoped, tag = 'scoped memory for tpu_custom_call.1']
    #allocation4 [shape = 's32[1]{0}', space=sflag, size = 0x4, scoped, tag = 'scoped memory for tpu_custom_call.1']
    #allocation5 [shape = 'u8[8192]{0}', space=vmem, size = 0x2000, scoped, tag = 'input window, operand 2, single buffered']
    #allocation6 [shape = 's32[1]{0}', space=sflag, size = 0x4, scoped, tag = 'scoped memory for tpu_custom_call.1']
    #allocation7 [shape = 'u8[4096]{0}', space=vmem, size = 0x1000, scoped, tag = 'output window, operand 0, single buffered']
    %13 = vsyncpa [#allocation3], 0
    %14 = vsyncpa [#allocation6], 0
    %15 = vsyncpa [#allocation4], 0
    // Predicated region
    $region2: #{tpu_custom_call.1} parent=1 // pred_check
      _
    $region3: #{tpu_custom_call.1} parent=1 // pred_check_branch
      %17 = sbr.rel (0) target = $region5
    $region4: #{tpu_custom_call.1} parent=1 // pred_region
      _
    $region5: #{tpu_custom_call.1} parent=1 // pred_fallthru
      _
    // Predicated region
    $region6: #{tpu_custom_call.1} parent=1 // pred_check
      _
    $region7: #{tpu_custom_call.1} parent=1 // pred_check_branch
      %19 = sbr.rel (0) target = $region9
    $region8: #{tpu_custom_call.1} parent=1 // pred_region
      %s21 = ssub.s32 128, 128
      %22 = vsyncadd [#allocation3], %s21
      %s24 = sshll.u32 [#allocation2], 4
      %s25 = int_to_ptr.vmem [resolvable:$true] %s24
      %27 = dma.hbm_to_vmem [thread:$0]  %s1, 128, %s25, [#allocation3]
    $region9: #{tpu_custom_call.1} parent=1 // pred_fallthru
      _
    // Predicated region
    $region10: #{tpu_custom_call.1} parent=1 // pred_check
      _
    $region11: #{tpu_custom_call.1} parent=1 // pred_check_branch
      %29 = sbr.rel (0) target = $region13
    $region12: #{tpu_custom_call.1} parent=1 // pred_region
      %s31 = ssub.s32 256, 256
      %32 = vsyncadd [#allocation6], %s31
      %s33 = sshll.u32 [#allocation5], 4
      %s34 = int_to_ptr.vmem [resolvable:$true] %s33
      %39 = dma.hbm_to_vmem [thread:$0]  %s2, 256, %s34, [#allocation6], 128, 128, 8
    $region13: #{tpu_custom_call.1} parent=1 // pred_fallthru
      _
    // Predicated region
    $region14: #{tpu_custom_call.1} parent=1 // pred_check
      _
    $region15: #{tpu_custom_call.1} parent=1 // pred_check_branch
      %41 = sbr.rel (0) target = $region17
    $region16: #{tpu_custom_call.1} parent=1 // pred_region
      _
    $region17: #{tpu_custom_call.1} parent=1 // pred_fallthru
      _
    // Predicated region
    $region18: #{tpu_custom_call.1} parent=1 // pred_check
      _
    $region19: #{tpu_custom_call.1} parent=1 // pred_check_branch
      %43 = sbr.rel (0) target = $region21
    $region20: #{tpu_custom_call.1} parent=1 // pred_region
      _
    $region21: #{tpu_custom_call.1} parent=1 // pred_fallthru
      _
    // Predicated region
    $region22: #{tpu_custom_call.1} parent=1 // pred_check
      _
    $region23: #{tpu_custom_call.1} parent=1 // pred_check_branch
      %45 = sbr.rel (0) target = $region25
    $region24: #{tpu_custom_call.1} parent=1 // pred_region
      _
    $region25: #{tpu_custom_call.1} parent=1 // pred_fallthru
      _
    // Predicated region
    $region26: #{tpu_custom_call.1} parent=1 // pred_check
      _
    $region27: #{tpu_custom_call.1} parent=1 // pred_check_branch
      %47 = sbr.rel (0) target = $region29
    $region28: #{tpu_custom_call.1} parent=1 // pred_region
      _
    $region29: #{tpu_custom_call.1} parent=1 // pred_fallthru
      _
    // Predicated region
    $region30: #{tpu_custom_call.1} parent=1 // pred_check
      _
    $region31: #{tpu_custom_call.1} parent=1 // pred_check_branch
      %49 = sbr.rel (0) target = $region33
    $region32: #{tpu_custom_call.1} parent=1 // pred_region
      _
    $region33: #{tpu_custom_call.1} parent=1 // pred_fallthru
      _
    // Predicated region
    $region34: #{tpu_custom_call.1} parent=1 // pred_check
      _
    $region35: #{tpu_custom_call.1} parent=1 // pred_check_branch
      %51 = sbr.rel (0) target = $region37
    $region36: #{tpu_custom_call.1} parent=1 // pred_region
      %52 = dma.done [#allocation3], 128
    $region37: #{tpu_custom_call.1} parent=1 // pred_fallthru
      _
    // Predicated region
    $region38: #{tpu_custom_call.1} parent=1 // pred_check
      _
    $region39: #{tpu_custom_call.1} parent=1 // pred_check_branch
      %54 = sbr.rel (0) target = $region41
    $region40: #{tpu_custom_call.1} parent=1 // pred_region
      %55 = dma.done [#allocation6], 256
    $region41: #{tpu_custom_call.1} parent=1 // pred_fallthru
      _
    %v56 = vld [vmem:[%s0] sm:$0xff]
    %v57 = vld [vmem:[#allocation5] sm:$0xff]
    %v58 = vld [vmem:[#allocation5 + $0x8] sm:$0x3]
    %v59 = vld [vmem:[%s3] sm:$0x1]
    %v61 = vlaneseq
    %v62 = vshrl.u32 %v61, 7
    %v63 = vsub.s32 0, %v62
    %v64 = vrot.slane %v59, %v63
    %vm66 = vcmask 80896
    %v68 = vsel %vm66, %v56, 0
    %vm70 = vcmask 1041408
    %v72 = vsel %vm70, %v58, 0
    %74 = vmatprep.subr.mxu0 0.0
    %75 = vmatpush1.msra.mxu0 0.0
    %76 = vmatprep.subr.mxu0 0.0
    %77 = vmatpush1.msra.mxu0 0.0
    %78 = vmatprep.subr.mxu0 0.0
    %79 = vmatpush1.msra.mxu0 0.0
    %80 = vmatprep.subr.mxu0 0.0
    %81 = vmatpush1.msra.mxu0 0.0
    %82 = vmatprep.subr.mxu0 0.0
    %83 = vmatpush1.msra.mxu0 0.0
    %84 = vmatprep.subr.mxu0 0.0
    %85 = vmatpush1.msra.mxu0 0.0
    %86 = vmatprep.subr.mxu0 0.0
    %87 = vmatpush1.msra.mxu0 0.0
    %88 = vmatprep.subr.mxu0 0.0
    %89 = vmatpush1.msra.mxu0 0.0
    %90 = vmatprep.subr.mxu0 0.0
    %91 = vmatpush1.msra.mxu0 0.0
    %92 = vmatprep.subr.mxu0 0.0
    %93 = vmatpush1.msra.mxu0 0.0
    %94 = vmatprep.subr.mxu0 0.0
    %95 = vmatpush1.msra.mxu0 0.0
    %96 = vmatprep.subr.mxu0 0.0
    %97 = vmatpush1.msra.mxu0 0.0
    %98 = vmatprep.subr.mxu0 0.0
    %99 = vmatpush1.msra.mxu0 0.0
    %100 = vmatprep.subr.mxu0 0.0
    %101 = vmatpush1.msra.mxu0 0.0
    %102 = vmatprep.subr.mxu0 0.0
    %103 = vmatpush1.msra.mxu0 %v72
    %104 = vmatprep.subr.mxu0 0.0
    %105 = vmatpush1.msra.mxu0 %v57
    %106 = vmatprep.subr.mxu0 0.0
    %107 = vmatpush2.msra.mxu0 0.0
    %108 = vmatprep.subr.mxu0 0.0
    %109 = vmatpush2.msra.mxu0 0.0
    %110 = vmatprep.subr.mxu0 0.0
    %111 = vmatpush2.msra.mxu0 0.0
    %112 = vmatprep.subr.mxu0 0.0
    %113 = vmatpush2.msra.mxu0 0.0
    %114 = vmatprep.subr.mxu0 0.0
    %115 = vmatpush2.msra.mxu0 0.0
    %116 = vmatprep.subr.mxu0 0.0
    %117 = vmatpush2.msra.mxu0 0.0
    %118 = vmatprep.subr.mxu0 0.0
    %119 = vmatpush2.msra.mxu0 0.0
    %120 = vmatprep.subr.mxu0 0.0
    %121 = vmatpush2.msra.mxu0 0.0
    %122 = vmatprep.subr.mxu0 0.0
    %123 = vmatpush2.msra.mxu0 0.0
    %124 = vmatprep.subr.mxu0 0.0
    %125 = vmatpush2.msra.mxu0 0.0
    %126 = vmatprep.subr.mxu0 0.0
    %127 = vmatpush2.msra.mxu0 0.0
    %128 = vmatprep.subr.mxu0 0.0
    %129 = vmatpush2.msra.mxu0 0.0
    %130 = vmatprep.subr.mxu0 0.0
    %131 = vmatpush2.msra.mxu0 0.0
    %132 = vmatprep.subr.mxu0 0.0
    %133 = vmatpush2.msra.mxu0 0.0
    %134 = vmatprep.subr.mxu0 0.0
    %135 = vmatpush2.msra.mxu0 0.0
    %136 = vmatprep.subr.mxu0 0.0
    %137 = vmatpush2.msra.mxu0 0.0
    %138 = vmatprep.mubr.f32.mxu0 0.0
    %139 = vmatmul.mubr.f32.gmra.mxu0 %v68
    %v140 = vpop.f32.mrf.mxu0
    %v141 = vadd.f32 %v64, %v140
    %v142 = vpop.f32.mrf.mxu0
    %143 = vdwg.mxu0
    %v144 = vmax.f32 %v141, 0.0
    %v145 = vld [vmem:[%s4] sm:$0xff]
    %v146 = vld [vmem:[%s4 + $0x8] sm:$0xff]
    %v147 = vld [vmem:[%s4 + $0x10] sm:$0xff]
    %v148 = vld [vmem:[%s4 + $0x18] sm:$0xff]
    %v149 = vld [vmem:[%s4 + $0x20] sm:$0xff]
    %v150 = vld [vmem:[%s4 + $0x28] sm:$0xff]
    %v151 = vld [vmem:[%s4 + $0x30] sm:$0xff]
    %v152 = vld [vmem:[%s4 + $0x38] sm:$0xff]
    %v153 = vld [vmem:[%s5] sm:$0x1]
    %v155 = vlaneseq
    %v156 = vshrl.u32 %v155, 7
    %v157 = vsub.s32 0, %v156
    %v158 = vrot.slane %v153, %v157
    %vm160 = vcmask 523264
    %v162 = vsel %vm160, %v144, 0
    %164 = vmatprep.subr.mxu0 0.0
    %165 = vmatpush1.msra.mxu0 0.0
    %166 = vmatprep.subr.mxu0 0.0
    %167 = vmatpush1.msra.mxu0 0.0
    %168 = vmatprep.subr.mxu0 0.0
    %169 = vmatpush1.msra.mxu0 0.0
    %170 = vmatprep.subr.mxu0 0.0
    %171 = vmatpush1.msra.mxu0 0.0
    %172 = vmatprep.subr.mxu0 0.0
    %173 = vmatpush1.msra.mxu0 0.0
    %174 = vmatprep.subr.mxu0 0.0
    %175 = vmatpush1.msra.mxu0 0.0
    %176 = vmatprep.subr.mxu0 0.0
    %177 = vmatpush1.msra.mxu0 0.0
    %178 = vmatprep.subr.mxu0 0.0
    %179 = vmatpush1.msra.mxu0 0.0
    %180 = vmatprep.subr.mxu0 0.0
    %181 = vmatpush1.msra.mxu0 %v152
    %182 = vmatprep.subr.mxu0 0.0
    %183 = vmatpush1.msra.mxu0 %v151
    %184 = vmatprep.subr.mxu0 0.0
    %185 = vmatpush1.msra.mxu0 %v150
    %186 = vmatprep.subr.mxu0 0.0
    %187 = vmatpush1.msra.mxu0 %v149
    %188 = vmatprep.subr.mxu0 0.0
    %189 = vmatpush1.msra.mxu0 %v148
    %190 = vmatprep.subr.mxu0 0.0
    %191 = vmatpush1.msra.mxu0 %v147
    %192 = vmatprep.subr.mxu0 0.0
    %193 = vmatpush1.msra.mxu0 %v146
    %194 = vmatprep.subr.mxu0 0.0
    %195 = vmatpush1.msra.mxu0 %v145
    %196 = vmatprep.subr.mxu0 0.0
    %197 = vmatpush2.msra.mxu0 0.0
    %198 = vmatprep.subr.mxu0 0.0
    %199 = vmatpush2.msra.mxu0 0.0
    %200 = vmatprep.subr.mxu0 0.0
    %201 = vmatpush2.msra.mxu0 0.0
    %202 = vmatprep.subr.mxu0 0.0
    %203 = vmatpush2.msra.mxu0 0.0
    %204 = vmatprep.subr.mxu0 0.0
    %205 = vmatpush2.msra.mxu0 0.0
    %206 = vmatprep.subr.mxu0 0.0
    %207 = vmatpush2.msra.mxu0 0.0
    %208 = vmatprep.subr.mxu0 0.0
    %209 = vmatpush2.msra.mxu0 0.0
    %210 = vmatprep.subr.mxu0 0.0
    %211 = vmatpush2.msra.mxu0 0.0
    %212 = vmatprep.subr.mxu0 0.0
    %213 = vmatpush2.msra.mxu0 0.0
    %214 = vmatprep.subr.mxu0 0.0
    %215 = vmatpush2.msra.mxu0 0.0
    %216 = vmatprep.subr.mxu0 0.0
    %217 = vmatpush2.msra.mxu0 0.0
    %218 = vmatprep.subr.mxu0 0.0
    %219 = vmatpush2.msra.mxu0 0.0
    %220 = vmatprep.subr.mxu0 0.0
    %221 = vmatpush2.msra.mxu0 0.0
    %222 = vmatprep.subr.mxu0 0.0
    %223 = vmatpush2.msra.mxu0 0.0
    %224 = vmatprep.subr.mxu0 0.0
    %225 = vmatpush2.msra.mxu0 0.0
    %226 = vmatprep.subr.mxu0 0.0
    %227 = vmatpush2.msra.mxu0 0.0
    %228 = vmatprep.mubr.f32.mxu0 0.0
    %229 = vmatmul.mubr.f32.gmra.mxu0 %v162
    %v230 = vpop.f32.mrf.mxu0
    %v231 = vadd.f32 %v158, %v230
    %v232 = vpop.f32.mrf.mxu0
    %233 = vdwg.mxu0
    %v234 = vmax.f32 %v231, 0.0
    %v235 = vld [vmem:[%s6] sm:$0xff]
    %v236 = vld [vmem:[%s6 + $0x8] sm:$0xff]
    %v237 = vld [vmem:[%s6 + $0x10] sm:$0xff]
    %v238 = vld [vmem:[%s6 + $0x18] sm:$0xff]
    %v239 = vld [vmem:[%s6 + $0x20] sm:$0xff]
    %v240 = vld [vmem:[%s6 + $0x28] sm:$0xff]
    %v241 = vld [vmem:[%s6 + $0x30] sm:$0xff]
    %v242 = vld [vmem:[%s6 + $0x38] sm:$0xff]
    %v243 = vld [vmem:[%s7] sm:$0x1]
    %v245 = vlaneseq
    %v246 = vshrl.u32 %v245, 7
    %v247 = vsub.s32 0, %v246
    %v248 = vrot.slane %v243, %v247
    %v251 = vsel %vm160, %v234, 0
    %253 = vmatprep.subr.mxu0 0.0
    %254 = vmatpush1.msra.mxu0 0.0
    %255 = vmatprep.subr.mxu0 0.0
    %256 = vmatpush1.msra.mxu0 0.0
    %257 = vmatprep.subr.mxu0 0.0
    %258 = vmatpush1.msra.mxu0 0.0
    %259 = vmatprep.subr.mxu0 0.0
    %260 = vmatpush1.msra.mxu0 0.0
    %261 = vmatprep.subr.mxu0 0.0
    %262 = vmatpush1.msra.mxu0 0.0
    %263 = vmatprep.subr.mxu0 0.0
    %264 = vmatpush1.msra.mxu0 0.0
    %265 = vmatprep.subr.mxu0 0.0
    %266 = vmatpush1.msra.mxu0 0.0
    %267 = vmatprep.subr.mxu0 0.0
    %268 = vmatpush1.msra.mxu0 0.0
    %269 = vmatprep.subr.mxu0 0.0
    %270 = vmatpush1.msra.mxu0 %v242
    %271 = vmatprep.subr.mxu0 0.0
    %272 = vmatpush1.msra.mxu0 %v241
    %273 = vmatprep.subr.mxu0 0.0
    %274 = vmatpush1.msra.mxu0 %v240
    %275 = vmatprep.subr.mxu0 0.0
    %276 = vmatpush1.msra.mxu0 %v239
    %277 = vmatprep.subr.mxu0 0.0
    %278 = vmatpush1.msra.mxu0 %v238
    %279 = vmatprep.subr.mxu0 0.0
    %280 = vmatpush1.msra.mxu0 %v237
    %281 = vmatprep.subr.mxu0 0.0
    %282 = vmatpush1.msra.mxu0 %v236
    %283 = vmatprep.subr.mxu0 0.0
    %284 = vmatpush1.msra.mxu0 %v235
    %285 = vmatprep.subr.mxu0 0.0
    %286 = vmatpush2.msra.mxu0 0.0
    %287 = vmatprep.subr.mxu0 0.0
    %288 = vmatpush2.msra.mxu0 0.0
    %289 = vmatprep.subr.mxu0 0.0
    %290 = vmatpush2.msra.mxu0 0.0
    %291 = vmatprep.subr.mxu0 0.0
    %292 = vmatpush2.msra.mxu0 0.0
    %293 = vmatprep.subr.mxu0 0.0
    %294 = vmatpush2.msra.mxu0 0.0
    %295 = vmatprep.subr.mxu0 0.0
    %296 = vmatpush2.msra.mxu0 0.0
    %297 = vmatprep.subr.mxu0 0.0
    %298 = vmatpush2.msra.mxu0 0.0
    %299 = vmatprep.subr.mxu0 0.0
    %300 = vmatpush2.msra.mxu0 0.0
    %301 = vmatprep.subr.mxu0 0.0
    %302 = vmatpush2.msra.mxu0 0.0
    %303 = vmatprep.subr.mxu0 0.0
    %304 = vmatpush2.msra.mxu0 0.0
    %305 = vmatprep.subr.mxu0 0.0
    %306 = vmatpush2.msra.mxu0 0.0
    %307 = vmatprep.subr.mxu0 0.0
    %308 = vmatpush2.msra.mxu0 0.0
    %309 = vmatprep.subr.mxu0 0.0
    %310 = vmatpush2.msra.mxu0 0.0
    %311 = vmatprep.subr.mxu0 0.0
    %312 = vmatpush2.msra.mxu0 0.0
    %313 = vmatprep.subr.mxu0 0.0
    %314 = vmatpush2.msra.mxu0 0.0
    %315 = vmatprep.subr.mxu0 0.0
    %316 = vmatpush2.msra.mxu0 0.0
    %317 = vmatprep.mubr.f32.mxu0 0.0
    %318 = vmatmul.mubr.f32.gmra.mxu0 %v251
    %v319 = vpop.f32.mrf.mxu0
    %v320 = vadd.f32 %v248, %v319
    %v321 = vpop.f32.mrf.mxu0
    %322 = vdwg.mxu0
    %v323 = vld [vmem:[#allocation2] sm:$0xff]
    %vm324 = vcmask 48128
    %v325 = vsel %vm324, %v323, 0.0
    %326 = vadd.xlane.f32.xlu0 %v325
    %v327 = vpop.xlane.xlu0 %326
    %vm328 = vcmp.lt.f32.partialorder %v327, 1e-08
    %v329 = vlaneseq
    %v330 = vand.u32 %v329, 127
    %vm331 = vcmp.eq.s32.totalorder %v330, 0
    %v332 = vsel %vm328, 1, 0
    %vm333 = vcmp.eq.s32.totalorder %v332, 1
    %vm334 = vmand %vm333, %vm331
    %v335 = vsel %vm334, 1.0, %v323
    %v336 = vsub.f32 1.0, %v335
    %v337 = vmul.f32 %v336, -1e+20
    %v338 = vadd.f32 %v320, %v337
    %339 = vst.msk [vmem:[#allocation7] sm:$0xff] %vm324, %v338
    // Predicated region
    $region42: #{tpu_custom_call.1} parent=1 // pred_check
      _
    $region43: #{tpu_custom_call.1} parent=1 // pred_check_branch
      %341 = sbr.rel (0) target = $region45
    $region44: #{tpu_custom_call.1} parent=1 // pred_region
      %s343 = ssub.s32 128, 128
      %344 = vsyncadd [#allocation4], %s343
      %s346 = sshll.u32 [#allocation7], 4
      %s347 = int_to_ptr.vmem [resolvable:$true] %s346
      %349 = dma.vmem_to_hbm [thread:$0]  %s347, 128, %s8, [#allocation4]
    $region45: #{tpu_custom_call.1} parent=1 // pred_fallthru
      _
    // Predicated region
    $region46: #{tpu_custom_call.1} parent=1 // pred_check
      _
    $region47: #{tpu_custom_call.1} parent=1 // pred_check_branch
      %351 = sbr.rel (0) target = $region49
    $region48: #{tpu_custom_call.1} parent=1 // pred_region
      %352 = dma.done [#allocation4], 128
    $region49: #{tpu_custom_call.1} parent=1 // pred_fallthru
      _
    %353 = vsyncpa [#allocation3], 1
    %354 = vsyncpa [#allocation6], 1
    %355 = vsyncpa [#allocation4], 1

</llo_original>
